<compile_context>
chip_gen: v7x
topology: tpu7x:2x2x1
jax: 0.10.0
libtpu: 0.0.40
codegen_flags: <defaults>
</compile_context>

<pallas_src>
import jax
import jax.numpy as jnp
from jax.experimental import pallas as pl
from jax.experimental.pallas import tpu as pltpu


def spatial_attention_kernel(x_ref, w_ref, o_ref):
    """x_ref: (NB, C, L) VMEM; w_ref: (2*K,) f32 SMEM; o_ref: (NB, L) VMEM."""
    x = x_ref[...].astype(jnp.float32)            # (NB, C, L), cast once on load
    nb, _, length = x.shape

    avg = jnp.mean(x, axis=1)                     # (NB, L) channel mean
    mx = jnp.max(x, axis=1)                       # (NB, L) channel max

    k_taps = w_ref.shape[0] // 2
    pad = (k_taps - 1) // 2
    lane = jax.lax.broadcasted_iota(jnp.int32, (nb, length), 1)

    acc = jnp.zeros((nb, length), jnp.float32)
    for k in range(k_taps):                       # static, fully unrolled taps
        sh = pad - k                              # lane shift for this tap
        if sh == 0:
            r_avg, r_mx = avg, mx
        else:
            # XLU lane rotation (co-issues with the VPU multiply-adds).
            r_avg = pltpu.roll(avg, shift=sh % length, axis=1)
            r_mx = pltpu.roll(mx, shift=sh % length, axis=1)
        # Scalar weights straight from SMEM fold into the vmul.
        tap = w_ref[k] * r_avg + w_ref[k_taps + k] * r_mx
        if sh > 0:                                # zero wrapped lanes (left pad)
            tap = jnp.where(lane >= sh, tap, 0.0)
        elif sh < 0:                              # zero wrapped lanes (right pad)
            tap = jnp.where(lane < length + sh, tap, 0.0)
        acc = acc + tap

    o_ref[...] = jax.nn.sigmoid(acc).astype(o_ref.dtype)


def _batch_tile(n):
    # Sublane-dense batch tile; NB=8 keeps >= 2 parallel grid steps (v7x has
    # two TensorCores).  Small / non-multiple-of-8 batches fold entirely.
    if n > 8 and n % 8 == 0:
        return 8
    return n


def spatial_attention(x, w):
    """x: (N, C, L); w: (2, K) Conv1d weight with the out-channel squeezed."""
    n, c, length = x.shape
    two, k = w.shape
    assert two == 2 and k in (3, 7), "kernel size must be 3 or 7"

    nb = _batch_tile(n)
    grid = (n // nb,)
    w_flat = w.reshape(-1).astype(jnp.float32)    # (2K,) scalars -> SMEM

    itemsize = jnp.dtype(x.dtype).itemsize
    cost = pl.CostEstimate(
        flops=2 * n * c * length + 4 * k * n * length,
        transcendentals=n * length,
        bytes_accessed=n * c * length * itemsize + n * length * itemsize + 2 * k * 4,
    )

    out2d = pl.pallas_call(
        spatial_attention_kernel,
        out_shape=jax.ShapeDtypeStruct((n, length), x.dtype),
        grid_spec=pltpu.PrefetchScalarGridSpec(
            num_scalar_prefetch=0,
            grid=grid,
            in_specs=[
                pl.BlockSpec((nb, c, length), lambda i: (i, 0, 0)),
                pl.BlockSpec(memory_space=pltpu.MemorySpace.SMEM),
            ],
            out_specs=pl.BlockSpec((nb, length), lambda i: (i, 0)),
        ),
        compiler_params=pltpu.CompilerParams(
            dimension_semantics=("parallel",)),
        cost_estimate=cost,
    )(x, w_flat)

    return out2d.reshape(n, 1, length)


def spatial_attention_ref(x, w):
    """Plain-JAX reference mirroring the PyTorch forward."""
    pad = (w.shape[1] - 1) // 2
    avg = jnp.mean(x, axis=1, keepdims=True)
    mx = jnp.max(x, axis=1, keepdims=True)
    feat = jnp.concatenate([avg, mx], axis=1)                  # (N, 2, L)
    out = jax.lax.conv_general_dilated(
        feat, w[None],                                         # (1, 2, K)
        window_strides=(1,), padding=[(pad, pad)],
        dimension_numbers=("NCH", "OIH", "NCH"),
        precision=jax.lax.Precision.HIGHEST)
    return jax.nn.sigmoid(out)


if __name__ == "__main__":
    key = jax.random.PRNGKey(0)
    kx, kw3, kw7 = jax.random.split(key, 3)

    N, C, L = 16, 32, 256
    x = jax.random.normal(kx, (N, C, L), dtype=jnp.float32)

    # ECGNet's attn_1 uses kernel_size=3; the module also allows 7 — check both.
    for ksz, kk in ((3, kw3), (7, kw7)):
        w = (jax.random.normal(kk, (2, ksz), dtype=jnp.float32)
             * (1.0 / (2 * ksz) ** 0.5))
        out = jax.block_until_ready(spatial_attention(x, w))
        ref = spatial_attention_ref(x, w)
        assert out.shape == (N, 1, L)
        assert jnp.allclose(out, ref, atol=1e-5, rtol=1e-5), f"mismatch (K={ksz})"

    print("KERNEL_OK")
</pallas_src>

<mosaic_0001>
module attributes {stable_mosaic.version = 11 : i64} {
  func.func @spatial_attention_kernel(%arg0: i32, %arg1: memref<8x32x256xf32, #tpu.memory_space<vmem>>, %arg2: memref<6xf32, #tpu.memory_space<smem>>, %arg3: memref<8x256xf32, #tpu.memory_space<vmem>>) attributes {dimension_semantics = [#tpu.dimension_semantics<parallel>], iteration_bounds = array<i64: 2>, scalar_prefetch = 0 : i64, scratch_operands = 0 : i64, tpu.core_type = #tpu.core_type<tc>, window_params = [{transform_indices = @transform_0, window_bounds = array<i64: 8, 32, 256>}, {transform_indices = @transform_1, window_bounds = array<i64: 6>}, {transform_indices = @transform_2, window_bounds = array<i64: 8, 256>}]} {
    %c0 = arith.constant 0 : index
    %c0_0 = arith.constant 0 : index
    %c0_1 = arith.constant 0 : index
    %0 = vector.load %arg1[%c0, %c0_0, %c0_1] : memref<8x32x256xf32, #tpu.memory_space<vmem>>, vector<8x32x256xf32>
    %cst = arith.constant dense<0.000000e+00> : vector<8x256xf32>
    %1 = vector.multi_reduction <add>, %0, %cst [1] : vector<8x32x256xf32> to vector<8x256xf32>
    %cst_2 = arith.constant 3.200000e+01 : f32
    %2 = vector.broadcast %cst_2 : f32 to vector<8x256xf32>
    %3 = arith.divf %1, %2 : vector<8x256xf32>
    %cst_3 = arith.constant dense<0xFF800000> : vector<8x256xf32>
    %4 = vector.multi_reduction <maximumf>, %0, %cst_3 [1] : vector<8x32x256xf32> to vector<8x256xf32>
    %5 = tpu.iota {dimensions = array<i32: 1>} : vector<8x256xi32>
    %cst_4 = arith.constant 0.000000e+00 : f32
    %6 = vector.broadcast %cst_4 : f32 to vector<8x256xf32>
    %c1_i32 = arith.constant 1 : i32
    %7 = tpu.dynamic_rotate %3 by %c1_i32 dim 1 : vector<8x256xf32>, i32 -> vector<8x256xf32>
    %c1_i32_5 = arith.constant 1 : i32
    %8 = tpu.dynamic_rotate %4 by %c1_i32_5 dim 1 : vector<8x256xf32>, i32 -> vector<8x256xf32>
    %c0_6 = arith.constant 0 : index
    %9 = memref.load %arg2[%c0_6] : memref<6xf32, #tpu.memory_space<smem>>
    %10 = vector.broadcast %9 : f32 to vector<8x256xf32>
    %11 = arith.mulf %10, %7 : vector<8x256xf32>
    %c3 = arith.constant 3 : index
    %12 = memref.load %arg2[%c3] : memref<6xf32, #tpu.memory_space<smem>>
    %13 = vector.broadcast %12 : f32 to vector<8x256xf32>
    %14 = arith.mulf %13, %8 : vector<8x256xf32>
    %15 = arith.addf %11, %14 : vector<8x256xf32>
    %c1_i32_7 = arith.constant 1 : i32
    %16 = vector.broadcast %c1_i32_7 : i32 to vector<8x256xi32>
    %17 = arith.cmpi sge, %5, %16 : vector<8x256xi32>
    %cst_8 = arith.constant 0.000000e+00 : f32
    %18 = vector.broadcast %cst_8 : f32 to vector<8x256xf32>
    %19 = arith.select %17, %15, %18 : vector<8x256xi1>, vector<8x256xf32>
    %20 = arith.addf %6, %19 : vector<8x256xf32>
    %c1 = arith.constant 1 : index
    %21 = memref.load %arg2[%c1] : memref<6xf32, #tpu.memory_space<smem>>
    %22 = vector.broadcast %21 : f32 to vector<8x256xf32>
    %23 = arith.mulf %22, %3 : vector<8x256xf32>
    %c4 = arith.constant 4 : index
    %24 = memref.load %arg2[%c4] : memref<6xf32, #tpu.memory_space<smem>>
    %25 = vector.broadcast %24 : f32 to vector<8x256xf32>
    %26 = arith.mulf %25, %4 : vector<8x256xf32>
    %27 = arith.addf %23, %26 : vector<8x256xf32>
    %28 = arith.addf %20, %27 : vector<8x256xf32>
    %c255_i32 = arith.constant 255 : i32
    %29 = tpu.dynamic_rotate %3 by %c255_i32 dim 1 : vector<8x256xf32>, i32 -> vector<8x256xf32>
    %c255_i32_9 = arith.constant 255 : i32
    %30 = tpu.dynamic_rotate %4 by %c255_i32_9 dim 1 : vector<8x256xf32>, i32 -> vector<8x256xf32>
    %c2 = arith.constant 2 : index
    %31 = memref.load %arg2[%c2] : memref<6xf32, #tpu.memory_space<smem>>
    %32 = vector.broadcast %31 : f32 to vector<8x256xf32>
    %33 = arith.mulf %32, %29 : vector<8x256xf32>
    %c5 = arith.constant 5 : index
    %34 = memref.load %arg2[%c5] : memref<6xf32, #tpu.memory_space<smem>>
    %35 = vector.broadcast %34 : f32 to vector<8x256xf32>
    %36 = arith.mulf %35, %30 : vector<8x256xf32>
    %37 = arith.addf %33, %36 : vector<8x256xf32>
    %c255_i32_10 = arith.constant 255 : i32
    %38 = vector.broadcast %c255_i32_10 : i32 to vector<8x256xi32>
    %39 = arith.cmpi slt, %5, %38 : vector<8x256xi32>
    %cst_11 = arith.constant 0.000000e+00 : f32
    %40 = vector.broadcast %cst_11 : f32 to vector<8x256xf32>
    %41 = arith.select %39, %37, %40 : vector<8x256xi1>, vector<8x256xf32>
    %42 = arith.addf %28, %41 : vector<8x256xf32>
    %43 = arith.negf %42 : vector<8x256xf32>
    %44 = math.exp %43 : vector<8x256xf32>
    %cst_12 = arith.constant 1.000000e+00 : f32
    %45 = vector.broadcast %cst_12 : f32 to vector<8x256xf32>
    %46 = arith.addf %45, %44 : vector<8x256xf32>
    %47 = arith.divf %45, %46 : vector<8x256xf32>
    %c0_13 = arith.constant 0 : index
    %c0_14 = arith.constant 0 : index
    %48 = vector.load %arg3[%c0_13, %c0_14] : memref<8x256xf32, #tpu.memory_space<vmem>>, vector<8x256xf32>
    tpu.vector_store %arg3[%c0_13, %c0_14], %47 {strides = array<i32>} : memref<8x256xf32, #tpu.memory_space<vmem>>, vector<8x256xf32>,
    return
  }
  func.func @transform_0(%arg0: i32) -> (i32, i32, i32) {
    %c0_i32 = arith.constant 0 : i32
    %c0_i32_0 = arith.constant 0 : i32
    %c0_i32_1 = arith.constant 0 : i32
    return %arg0, %c0_i32, %c0_i32_0 : i32, i32, i32
  }
  func.func @transform_1(%arg0: i32) -> i32 {
    %c0_i32 = arith.constant 0 : i32
    %c0_i32_0 = arith.constant 0 : i32
    return %c0_i32 : i32
  }
  func.func @transform_2(%arg0: i32) -> (i32, i32) {
    %c0_i32 = arith.constant 0 : i32
    %c0_i32_0 = arith.constant 0 : i32
    return %arg0, %c0_i32 : i32, i32
  }
}

</mosaic_0001>

<llo_original>
// kernel: tpu_custom_call.1
$region0: #{tpu_custom_call.1}
  #allocation0 [shape = 'u32[]', space=smem, size = 0x4, offset = 0x4, fixed_abs, tag = 'smem constant byte address 0x4 - core index']
  #allocation1 [shape = 'u32[144,128]{1,0:T(1,128)}', space=vmem, size = 0x12000, scoped, tag = 'internal scratch']
  %s0 = inlined_call_operand.hbm [shape: f32[16,32,256], index: 0, kind: input, shape index: {}]
  %s1 = inlined_call_operand.vmem [shape: f32[6], index: 1, kind: input, shape index: {}]
  %s2 = inlined_call_operand.hbm [shape: f32[16,256], index: 2, kind: output, shape index: {}]
  %s3 = sld [smem:[#allocation0]]
  $region49: #{tpu_custom_call.1} parent=0
    _
  %s5 = ssub.s32 1, %s3
  %s6 = scalar_select 0, %s5, %s3
  $region1: #{tpu_custom_call.1} parent=0
    #allocation2 [shape = 'u8[524288]{0}', space=vmem, size = 0x80000, scoped, tag = 'input window, operand 0']
    #allocation3 [shape = 's32[2]{0}', space=sflag, size = 0x8, scoped, tag = 'scoped memory for tpu_custom_call.1']
    #allocation4 [shape = 's32[2]{0}', space=sflag, size = 0x8, scoped, tag = 'scoped memory for tpu_custom_call.1']
    #allocation5 [shape = 's32[2]{0}', space=sflag, size = 0x8, scoped, tag = 'scoped memory for tpu_custom_call.1']
    #allocation6 [shape = 'u8[512]{0}', space=smem, size = 0x200, scoped, tag = 'input window, operand 1, single buffered']
    #allocation7 [shape = 'u8[16384]{0}', space=vmem, size = 0x4000, scoped, tag = 'output window, operand 0']
    %7 = vsyncpa [#allocation3], 0
    %s8 = scalar_lea.sflag [#allocation3], 1
    %9 = vsyncpa %s8, 0
    %10 = vsyncpa [#allocation5], 0
    %11 = vsyncpa [#allocation4], 0
    %s12 = scalar_lea.sflag [#allocation4], 1
    %13 = vsyncpa %s12, 0
    loop: start=0, step=1, limit=4
    $region2: #{tpu_custom_call.1} parent=1 // loop_pre_header
      _
    $region3: #{tpu_custom_call.1} parent=1 // loop_header
      %s15 = sphi 0, %s19
      %p16 = scmp.ge.s32.totalorder %s15, 4
      %s25 = sphi 0, %s27
      %s28 = sphi 0, %s25
      %s29 = sphi 0, %s28
      %s45 = sphi 0, %s29
      %s49 = sphi 0, %s49
      %s51 = sphi 0, %s49
      %s52 = sphi 0, %s51
      %s66 = sphi 0, %s52
      %s72 = sphi 0, %s74
      %s75 = sphi 0, %s72
      %s76 = sphi 0, %s75
      %s92 = sphi 0, %s76
    $region4: #{tpu_custom_call.1} parent=1 // loop_header_branch
      %18 = sbr.rel (%p16) target = $region8
    $region5: #{tpu_custom_call.1} parent=1 // loop_body
      %s20 = ssub.s32 %s15, 1
      %s21 = ssub.s32 %s15, 2
      %s22 = sadd.s32 %s15, 1
      %s23 = ssub.s32 %s15, %s22
      %p24 = scmp.eq.s32.totalorder %s23, 0
      %s26 = sadd.s32 %s25, 1
      %s27 = scalar_select %p24, %s25, %s26
      %p30 = pneg %p24
      %p31 = scmp.eq.s32.totalorder %s15, 1
      %p32 = por %p30, %p31
      %p33 = scmp.ne.s32.totalorder %s25, %s28
      %p34 = scmp.eq.s32.totalorder %s15, 0
      %p35 = por %p33, %p34
      %p36 = scmp.ne.s32.totalorder %s25, %s28
      %p37 = scmp.eq.s32.totalorder %s20, 1
      %p38 = por %p36, %p37
      %p39 = scmp.ne.s32.totalorder %s28, %s29
      %p40 = scmp.eq.s32.totalorder %s20, 0
      %p41 = por %p39, %p40
      %p42 = scmp.ne.s32.totalorder %s28, %s29
      %p43 = scmp.eq.s32.totalorder %s21, 1
      %p44 = por %p42, %p43
      %p46 = scmp.ne.s32.totalorder %s29, %s45
      %p47 = scmp.eq.s32.totalorder %s21, 0
      %p48 = por %p46, %p47
      %s50 = sadd.s32 %s49, 1
      %p53 = scmp.eq.s32.totalorder %s15, 1
      %p54 = scmp.ne.s32.totalorder %s49, %s51
      %p55 = scmp.eq.s32.totalorder %s15, 0
      %p56 = por %p54, %p55
      %p57 = scmp.ne.s32.totalorder %s49, %s51
      %p58 = scmp.eq.s32.totalorder %s20, 1
      %p59 = por %p57, %p58
      %p60 = scmp.ne.s32.totalorder %s51, %s52
      %p61 = scmp.eq.s32.totalorder %s20, 0
      %p62 = por %p60, %p61
      %p63 = scmp.ne.s32.totalorder %s51, %s52
      %p64 = scmp.eq.s32.totalorder %s21, 1
      %p65 = por %p63, %p64
      %p67 = scmp.ne.s32.totalorder %s52, %s66
      %p68 = scmp.eq.s32.totalorder %s21, 0
      %p69 = por %p67, %p68
      %s70 = ssub.s32 %s15, %s22
      %p71 = scmp.eq.s32.totalorder %s70, 0
      %s73 = sadd.s32 %s72, 1
      %s74 = scalar_select %p71, %s72, %s73
      %p77 = pneg %p71
      %p78 = scmp.eq.s32.totalorder %s15, 1
      %p79 = por %p77, %p78
      %p80 = scmp.ne.s32.totalorder %s72, %s75
      %p81 = scmp.eq.s32.totalorder %s15, 0
      %p82 = por %p80, %p81
      %p83 = scmp.ne.s32.totalorder %s72, %s75
      %p84 = scmp.eq.s32.totalorder %s20, 1
      %p85 = por %p83, %p84
      %p86 = scmp.ne.s32.totalorder %s75, %s76
      %p87 = scmp.eq.s32.totalorder %s20, 0
      %p88 = por %p86, %p87
      %p89 = scmp.ne.s32.totalorder %s75, %s76
      %p90 = scmp.eq.s32.totalorder %s21, 1
      %p91 = por %p89, %p90
      %p93 = scmp.ne.s32.totalorder %s76, %s92
      %p94 = scmp.eq.s32.totalorder %s21, 0
      %p95 = por %p93, %p94
      %p96 = scmp.le.s32.totalorder 1, %s15
      %p97 = scmp.lt.s32.totalorder %s15, 3
      %p98 = pnand %p96, %p97
      %p99 = pneg %p98
      // Predicated region
      $region9: #{tpu_custom_call.1} parent=5 // pred_check
        _
      $region10: #{tpu_custom_call.1} parent=5 // pred_check_branch
        %101 = sbr.rel (%p98) target = $region12
      $region11: #{tpu_custom_call.1} parent=5 // pred_region
        %s102 = ssub.s32 %s15, 1
        // Predicated region
        $region13: #{tpu_custom_call.1} parent=11 // pred_check
          %p103 = pneg %p62
        $region14: #{tpu_custom_call.1} parent=11 // pred_check_branch
          %105 = sbr.rel (%p103) target = $region16
        $region15: #{tpu_custom_call.1} parent=11 // pred_region
          %s107 = ssub.s32 16, 16
          %108 = vsyncadd [#allocation5], %s107
          %s110 = sshll.u32 %s1, 4
          %s111 = int_to_ptr.vmem [resolvable:$true] %s110
          %113 = dma.vmem_to_smem %s111, 16, [#allocation6], [#allocation5]
        $region16: #{tpu_custom_call.1} parent=11 // pred_fallthru
          _
      $region12: #{tpu_custom_call.1} parent=5 // pred_fallthru
        _
      %p114 = scmp.lt.s32.totalorder %s15, 2
      // Predicated region
      $region17: #{tpu_custom_call.1} parent=5 // pred_check
        %p115 = pneg %p114
      $region18: #{tpu_custom_call.1} parent=5 // pred_check_branch
        %117 = sbr.rel (%p115) target = $region20
      $region19: #{tpu_custom_call.1} parent=5 // pred_region
        // Predicated region
        $region21: #{tpu_custom_call.1} parent=19 // pred_check
          %p118 = pneg %p35
        $region22: #{tpu_custom_call.1} parent=19 // pred_check_branch
          %120 = sbr.rel (%p118) target = $region24
        $region23: #{tpu_custom_call.1} parent=19 // pred_region
          %s121 = sand.u32 %s25, 1
          %s122 = scalar_lea.sflag [#allocation3], %s121
          %s123 = sand.u32 %s25, 1
          %s124 = smul.addr %s123, 512
          %s125 = scalar_lea.vmem [#allocation2], %s124
          %s126 = smul.u32 8, %s15
          %s128 = ssub.s32 8192, 8192
          %129 = vsyncadd %s122, %s128
          %s130 = smul.addr %s126, 8
          %s131 = smul.addr %s130, 128
          %s132 = scalar_lea.hbm %s0, %s131
          %s133 = sshll.u32 %s125, 4
          %s134 = int_to_ptr.vmem [resolvable:$true] %s133
          %139 = dma.hbm_to_vmem [thread:$0]  %s132, 8192, %s134, %s122, 256, 256, 16
        $region24: #{tpu_custom_call.1} parent=19 // pred_fallthru
          _
      $region20: #{tpu_custom_call.1} parent=5 // pred_fallthru
        _
      %p140 = scmp.le.s32.totalorder 1, %s15
      %p141 = scmp.lt.s32.totalorder %s15, 3
      %p142 = pnand %p140, %p141
      %p143 = pneg %p142
      // Predicated region
      $region25: #{tpu_custom_call.1} parent=5 // pred_check
        _
      $region26: #{tpu_custom_call.1} parent=5 // pred_check_branch
        %145 = sbr.rel (%p142) target = $region28
      $region27: #{tpu_custom_call.1} parent=5 // pred_region
        %s146 = ssub.s32 %s15, 1
        %s147 = sand.u32 %s28, 1
        %s148 = scalar_lea.sflag [#allocation3], %s147
        %s149 = sand.u32 %s28, 1
        %s150 = smul.addr %s149, 512
        %s151 = scalar_lea.vmem [#allocation2], %s150
        // Predicated region
        $region29: #{tpu_custom_call.1} parent=27 // pred_check
          %p152 = pneg %p41
        $region30: #{tpu_custom_call.1} parent=27 // pred_check_branch
          %154 = sbr.rel (%p152) target = $region32
        $region31: #{tpu_custom_call.1} parent=27 // pred_region
          %155 = dma.done %s148, 8192
        $region32: #{tpu_custom_call.1} parent=27 // pred_fallthru
          _
        // Predicated region
        $region33: #{tpu_custom_call.1} parent=27 // pred_check
          %p156 = pneg %p62
        $region34: #{tpu_custom_call.1} parent=27 // pred_check_branch
          %158 = sbr.rel (%p156) target = $region36
        $region35: #{tpu_custom_call.1} parent=27 // pred_region
          %159 = dma.done [#allocation5], 16
        $region36: #{tpu_custom_call.1} parent=27 // pred_fallthru
          _
        %160 = sfence
        %s161 = sand.u32 %s28, 1
        %s162 = scalar_lea.sflag [#allocation3], %s161
        %s163 = sand.u32 %s28, 1
        %s164 = smul.addr %s163, 512
        %s165 = scalar_lea.vmem [#allocation2], %s164
        %p166 = pneg %p41
        %p167 = pneg %p38
        %p168 = pneg %p62
        %p169 = pneg %p59
        %p170 = pneg %p88
        %p171 = pneg %p85
        %s172 = sand.u32 %s75, 1
        %s173 = scalar_lea.sflag [#allocation4], %s172
        %s174 = sand.u32 %s75, 1
        %s175 = smul.addr %s174, 16
        %s176 = scalar_lea.vmem [#allocation7], %s175
        %s177 = smul.u32 8, %s20
        %v178 = vld [vmem:[%s151] sm:$0xff]
        %v179 = vld [vmem:[%s151 + $0x8] sm:$0xff]
        %v180 = vld [vmem:[%s151 + $0x10] sm:$0xff]
        %v181 = vld [vmem:[%s151 + $0x18] sm:$0xff]
        %v182 = vld [vmem:[%s151 + $0x20] sm:$0xff]
        %v183 = vld [vmem:[%s151 + $0x28] sm:$0xff]
        %v184 = vld [vmem:[%s151 + $0x30] sm:$0xff]
        %v185 = vld [vmem:[%s151 + $0x38] sm:$0xff]
        %v186 = vld [vmem:[%s151 + $0x40] sm:$0xff]
        %v187 = vld [vmem:[%s151 + $0x48] sm:$0xff]
        %v188 = vld [vmem:[%s151 + $0x50] sm:$0xff]
        %v189 = vld [vmem:[%s151 + $0x58] sm:$0xff]
        %v190 = vld [vmem:[%s151 + $0x60] sm:$0xff]
        %v191 = vld [vmem:[%s151 + $0x68] sm:$0xff]
        %v192 = vld [vmem:[%s151 + $0x70] sm:$0xff]
        %v193 = vld [vmem:[%s151 + $0x78] sm:$0xff]
        %v194 = vld [vmem:[%s151 + $0x80] sm:$0xff]
        %v195 = vld [vmem:[%s151 + $0x88] sm:$0xff]
        %v196 = vld [vmem:[%s151 + $0x90] sm:$0xff]
        %v197 = vld [vmem:[%s151 + $0x98] sm:$0xff]
        %v198 = vld [vmem:[%s151 + $0xa0] sm:$0xff]
        %v199 = vld [vmem:[%s151 + $0xa8] sm:$0xff]
        %v200 = vld [vmem:[%s151 + $0xb0] sm:$0xff]
        %v201 = vld [vmem:[%s151 + $0xb8] sm:$0xff]
        %v202 = vld [vmem:[%s151 + $0xc0] sm:$0xff]
        %v203 = vld [vmem:[%s151 + $0xc8] sm:$0xff]
        %v204 = vld [vmem:[%s151 + $0xd0] sm:$0xff]
        %v205 = vld [vmem:[%s151 + $0xd8] sm:$0xff]
        %v206 = vld [vmem:[%s151 + $0xe0] sm:$0xff]
        %v207 = vld [vmem:[%s151 + $0xe8] sm:$0xff]
        %v208 = vld [vmem:[%s151 + $0xf0] sm:$0xff]
        %v209 = vld [vmem:[%s151 + $0xf8] sm:$0xff]
        %v210 = vld [vmem:[%s151 + $0x100] sm:$0xff]
        %v211 = vld [vmem:[%s151 + $0x108] sm:$0xff]
        %v212 = vld [vmem:[%s151 + $0x110] sm:$0xff]
        %v213 = vld [vmem:[%s151 + $0x118] sm:$0xff]
        %v214 = vld [vmem:[%s151 + $0x120] sm:$0xff]
        %v215 = vld [vmem:[%s151 + $0x128] sm:$0xff]
        %v216 = vld [vmem:[%s151 + $0x130] sm:$0xff]
        %v217 = vld [vmem:[%s151 + $0x138] sm:$0xff]
        %v218 = vld [vmem:[%s151 + $0x140] sm:$0xff]
        %v219 = vld [vmem:[%s151 + $0x148] sm:$0xff]
        %v220 = vld [vmem:[%s151 + $0x150] sm:$0xff]
        %v221 = vld [vmem:[%s151 + $0x158] sm:$0xff]
        %v222 = vld [vmem:[%s151 + $0x160] sm:$0xff]
        %v223 = vld [vmem:[%s151 + $0x168] sm:$0xff]
        %v224 = vld [vmem:[%s151 + $0x170] sm:$0xff]
        %v225 = vld [vmem:[%s151 + $0x178] sm:$0xff]
        %v226 = vld [vmem:[%s151 + $0x180] sm:$0xff]
        %v227 = vld [vmem:[%s151 + $0x188] sm:$0xff]
        %v228 = vld [vmem:[%s151 + $0x190] sm:$0xff]
        %v229 = vld [vmem:[%s151 + $0x198] sm:$0xff]
        %v230 = vld [vmem:[%s151 + $0x1a0] sm:$0xff]
        %v231 = vld [vmem:[%s151 + $0x1a8] sm:$0xff]
        %v232 = vld [vmem:[%s151 + $0x1b0] sm:$0xff]
        %v233 = vld [vmem:[%s151 + $0x1b8] sm:$0xff]
        %v234 = vld [vmem:[%s151 + $0x1c0] sm:$0xff]
        %v235 = vld [vmem:[%s151 + $0x1c8] sm:$0xff]
        %v236 = vld [vmem:[%s151 + $0x1d0] sm:$0xff]
        %v237 = vld [vmem:[%s151 + $0x1d8] sm:$0xff]
        %v238 = vld [vmem:[%s151 + $0x1e0] sm:$0xff]
        %v239 = vld [vmem:[%s151 + $0x1e8] sm:$0xff]
        %v240 = vld [vmem:[%s151 + $0x1f0] sm:$0xff]
        %v241 = vld [vmem:[%s151 + $0x1f8] sm:$0xff]
        %v242 = vadd.f32 %v178, %v180
        %v243 = vadd.f32 %v242, %v182
        %v244 = vadd.f32 %v243, %v184
        %v245 = vrot.slane %v244, 4
        %v246 = vadd.f32 %v244, %v245
        %v247 = vrot.slane %v246, 2
        %v248 = vadd.f32 %v246, %v247
        %v249 = vrot.slane %v248, 1
        %v250 = vadd.f32 %v248, %v249
        %v251 = vadd.f32 %v179, %v181
        %v252 = vadd.f32 %v251, %v183
        %v253 = vadd.f32 %v252, %v185
        %v254 = vrot.slane %v253, 4
        %v255 = vadd.f32 %v253, %v254
        %v256 = vrot.slane %v255, 2
        %v257 = vadd.f32 %v255, %v256
        %v258 = vrot.slane %v257, 1
        %v259 = vadd.f32 %v257, %v258
        %v260 = vadd.f32 %v186, %v188
        %v261 = vadd.f32 %v260, %v190
        %v262 = vadd.f32 %v261, %v192
        %v263 = vrot.slane %v262, 4
        %v264 = vadd.f32 %v262, %v263
        %v265 = vrot.slane %v264, 2
        %v266 = vadd.f32 %v264, %v265
        %v267 = vrot.slane %v266, 1
        %v268 = vadd.f32 %v266, %v267
        %v269 = vadd.f32 %v187, %v189
        %v270 = vadd.f32 %v269, %v191
        %v271 = vadd.f32 %v270, %v193
        %v272 = vrot.slane %v271, 4
        %v273 = vadd.f32 %v271, %v272
        %v274 = vrot.slane %v273, 2
        %v275 = vadd.f32 %v273, %v274
        %v276 = vrot.slane %v275, 1
        %v277 = vadd.f32 %v275, %v276
        %v278 = vadd.f32 %v194, %v196
        %v279 = vadd.f32 %v278, %v198
        %v280 = vadd.f32 %v279, %v200
        %v281 = vrot.slane %v280, 4
        %v282 = vadd.f32 %v280, %v281
        %v283 = vrot.slane %v282, 2
        %v284 = vadd.f32 %v282, %v283
        %v285 = vrot.slane %v284, 1
        %v286 = vadd.f32 %v284, %v285
        %v287 = vadd.f32 %v195, %v197
        %v288 = vadd.f32 %v287, %v199
        %v289 = vadd.f32 %v288, %v201
        %v290 = vrot.slane %v289, 4
        %v291 = vadd.f32 %v289, %v290
        %v292 = vrot.slane %v291, 2
        %v293 = vadd.f32 %v291, %v292
        %v294 = vrot.slane %v293, 1
        %v295 = vadd.f32 %v293, %v294
        %v296 = vadd.f32 %v202, %v204
        %v297 = vadd.f32 %v296, %v206
        %v298 = vadd.f32 %v297, %v208
        %v299 = vrot.slane %v298, 4
        %v300 = vadd.f32 %v298, %v299
        %v301 = vrot.slane %v300, 2
        %v302 = vadd.f32 %v300, %v301
        %v303 = vrot.slane %v302, 1
        %v304 = vadd.f32 %v302, %v303
        %v305 = vadd.f32 %v203, %v205
        %v306 = vadd.f32 %v305, %v207
        %v307 = vadd.f32 %v306, %v209
        %v308 = vrot.slane %v307, 4
        %v309 = vadd.f32 %v307, %v308
        %v310 = vrot.slane %v309, 2
        %v311 = vadd.f32 %v309, %v310
        %v312 = vrot.slane %v311, 1
        %v313 = vadd.f32 %v311, %v312
        %v314 = vadd.f32 %v210, %v212
        %v315 = vadd.f32 %v314, %v214
        %v316 = vadd.f32 %v315, %v216
        %v317 = vrot.slane %v316, 4
        %v318 = vadd.f32 %v316, %v317
        %v319 = vrot.slane %v318, 2
        %v320 = vadd.f32 %v318, %v319
        %v321 = vrot.slane %v320, 1
        %v322 = vadd.f32 %v320, %v321
        %v323 = vadd.f32 %v211, %v213
        %v324 = vadd.f32 %v323, %v215
        %v325 = vadd.f32 %v324, %v217
        %v326 = vrot.slane %v325, 4
        %v327 = vadd.f32 %v325, %v326
        %v328 = vrot.slane %v327, 2
        %v329 = vadd.f32 %v327, %v328
        %v330 = vrot.slane %v329, 1
        %v331 = vadd.f32 %v329, %v330
        %v332 = vadd.f32 %v218, %v220
        %v333 = vadd.f32 %v332, %v222
        %v334 = vadd.f32 %v333, %v224
        %v335 = vrot.slane %v334, 4
        %v336 = vadd.f32 %v334, %v335
        %v337 = vrot.slane %v336, 2
        %v338 = vadd.f32 %v336, %v337
        %v339 = vrot.slane %v338, 1
        %v340 = vadd.f32 %v338, %v339
        %v341 = vadd.f32 %v219, %v221
        %v342 = vadd.f32 %v341, %v223
        %v343 = vadd.f32 %v342, %v225
        %v344 = vrot.slane %v343, 4
        %v345 = vadd.f32 %v343, %v344
        %v346 = vrot.slane %v345, 2
        %v347 = vadd.f32 %v345, %v346
        %v348 = vrot.slane %v347, 1
        %v349 = vadd.f32 %v347, %v348
        %v350 = vadd.f32 %v226, %v228
        %v351 = vadd.f32 %v350, %v230
        %v352 = vadd.f32 %v351, %v232
        %v353 = vrot.slane %v352, 4
        %v354 = vadd.f32 %v352, %v353
        %v355 = vrot.slane %v354, 2
        %v356 = vadd.f32 %v354, %v355
        %v357 = vrot.slane %v356, 1
        %v358 = vadd.f32 %v356, %v357
        %v359 = vadd.f32 %v227, %v229
        %v360 = vadd.f32 %v359, %v231
        %v361 = vadd.f32 %v360, %v233
        %v362 = vrot.slane %v361, 4
        %v363 = vadd.f32 %v361, %v362
        %v364 = vrot.slane %v363, 2
        %v365 = vadd.f32 %v363, %v364
        %v366 = vrot.slane %v365, 1
        %v367 = vadd.f32 %v365, %v366
        %v368 = vadd.f32 %v234, %v236
        %v369 = vadd.f32 %v368, %v238
        %v370 = vadd.f32 %v369, %v240
        %v371 = vrot.slane %v370, 4
        %v372 = vadd.f32 %v370, %v371
        %v373 = vrot.slane %v372, 2
        %v374 = vadd.f32 %v372, %v373
        %v375 = vrot.slane %v374, 1
        %v376 = vadd.f32 %v374, %v375
        %v377 = vadd.f32 %v235, %v237
        %v378 = vadd.f32 %v377, %v239
        %v379 = vadd.f32 %v378, %v241
        %v380 = vrot.slane %v379, 4
        %v381 = vadd.f32 %v379, %v380
        %v382 = vrot.slane %v381, 2
        %v383 = vadd.f32 %v381, %v382
        %v384 = vrot.slane %v383, 1
        %v385 = vadd.f32 %v383, %v384
        %v386 = vrcp.pop 32.0
        %v387 = vmul.f32 %v250, %v386
        %v388 = vmul.f32 %v259, %v386
        %v389 = vmul.f32 %v268, %v386
        %v390 = vmul.f32 %v277, %v386
        %v391 = vmul.f32 %v286, %v386
        %v392 = vmul.f32 %v295, %v386
        %v393 = vmul.f32 %v304, %v386
        %v394 = vmul.f32 %v313, %v386
        %v395 = vmul.f32 %v322, %v386
        %v396 = vmul.f32 %v331, %v386
        %v397 = vmul.f32 %v340, %v386
        %v398 = vmul.f32 %v349, %v386
        %v399 = vmul.f32 %v358, %v386
        %v400 = vmul.f32 %v367, %v386
        %v401 = vmul.f32 %v376, %v386
        %v402 = vmul.f32 %v385, %v386
        %v403 = vmax.f32 %v178, %v180
        %v404 = vmax.f32 %v403, %v182
        %v405 = vmax.f32 %v404, %v184
        %v406 = vrot.slane %v405, 4
        %v407 = vmax.f32 %v405, %v406
        %v408 = vrot.slane %v407, 2
        %v409 = vmax.f32 %v407, %v408
        %v410 = vrot.slane %v409, 1
        %v411 = vmax.f32 %v409, %v410
        %v412 = vmax.f32 %v179, %v181
        %v413 = vmax.f32 %v412, %v183
        %v414 = vmax.f32 %v413, %v185
        %v415 = vrot.slane %v414, 4
        %v416 = vmax.f32 %v414, %v415
        %v417 = vrot.slane %v416, 2
        %v418 = vmax.f32 %v416, %v417
        %v419 = vrot.slane %v418, 1
        %v420 = vmax.f32 %v418, %v419
        %v421 = vmax.f32 %v186, %v188
        %v422 = vmax.f32 %v421, %v190
        %v423 = vmax.f32 %v422, %v192
        %v424 = vrot.slane %v423, 4
        %v425 = vmax.f32 %v423, %v424
        %v426 = vrot.slane %v425, 2
        %v427 = vmax.f32 %v425, %v426
        %v428 = vrot.slane %v427, 1
        %v429 = vmax.f32 %v427, %v428
        %v430 = vmax.f32 %v187, %v189
        %v431 = vmax.f32 %v430, %v191
        %v432 = vmax.f32 %v431, %v193
        %v433 = vrot.slane %v432, 4
        %v434 = vmax.f32 %v432, %v433
        %v435 = vrot.slane %v434, 2
        %v436 = vmax.f32 %v434, %v435
        %v437 = vrot.slane %v436, 1
        %v438 = vmax.f32 %v436, %v437
        %v439 = vmax.f32 %v194, %v196
        %v440 = vmax.f32 %v439, %v198
        %v441 = vmax.f32 %v440, %v200
        %v442 = vrot.slane %v441, 4
        %v443 = vmax.f32 %v441, %v442
        %v444 = vrot.slane %v443, 2
        %v445 = vmax.f32 %v443, %v444
        %v446 = vrot.slane %v445, 1
        %v447 = vmax.f32 %v445, %v446
        %v448 = vmax.f32 %v195, %v197
        %v449 = vmax.f32 %v448, %v199
        %v450 = vmax.f32 %v449, %v201
        %v451 = vrot.slane %v450, 4
        %v452 = vmax.f32 %v450, %v451
        %v453 = vrot.slane %v452, 2
        %v454 = vmax.f32 %v452, %v453
        %v455 = vrot.slane %v454, 1
        %v456 = vmax.f32 %v454, %v455
        %v457 = vmax.f32 %v202, %v204
        %v458 = vmax.f32 %v457, %v206
        %v459 = vmax.f32 %v458, %v208
        %v460 = vrot.slane %v459, 4
        %v461 = vmax.f32 %v459, %v460
        %v462 = vrot.slane %v461, 2
        %v463 = vmax.f32 %v461, %v462
        %v464 = vrot.slane %v463, 1
        %v465 = vmax.f32 %v463, %v464
        %v466 = vmax.f32 %v203, %v205
        %v467 = vmax.f32 %v466, %v207
        %v468 = vmax.f32 %v467, %v209
        %v469 = vrot.slane %v468, 4
        %v470 = vmax.f32 %v468, %v469
        %v471 = vrot.slane %v470, 2
        %v472 = vmax.f32 %v470, %v471
        %v473 = vrot.slane %v472, 1
        %v474 = vmax.f32 %v472, %v473
        %v475 = vmax.f32 %v210, %v212
        %v476 = vmax.f32 %v475, %v214
        %v477 = vmax.f32 %v476, %v216
        %v478 = vrot.slane %v477, 4
        %v479 = vmax.f32 %v477, %v478
        %v480 = vrot.slane %v479, 2
        %v481 = vmax.f32 %v479, %v480
        %v482 = vrot.slane %v481, 1
        %v483 = vmax.f32 %v481, %v482
        %v484 = vmax.f32 %v211, %v213
        %v485 = vmax.f32 %v484, %v215
        %v486 = vmax.f32 %v485, %v217
        %v487 = vrot.slane %v486, 4
        %v488 = vmax.f32 %v486, %v487
        %v489 = vrot.slane %v488, 2
        %v490 = vmax.f32 %v488, %v489
        %v491 = vrot.slane %v490, 1
        %v492 = vmax.f32 %v490, %v491
        %v493 = vmax.f32 %v218, %v220
        %v494 = vmax.f32 %v493, %v222
        %v495 = vmax.f32 %v494, %v224
        %v496 = vrot.slane %v495, 4
        %v497 = vmax.f32 %v495, %v496
        %v498 = vrot.slane %v497, 2
        %v499 = vmax.f32 %v497, %v498
        %v500 = vrot.slane %v499, 1
        %v501 = vmax.f32 %v499, %v500
        %v502 = vmax.f32 %v219, %v221
        %v503 = vmax.f32 %v502, %v223
        %v504 = vmax.f32 %v503, %v225
        %v505 = vrot.slane %v504, 4
        %v506 = vmax.f32 %v504, %v505
        %v507 = vrot.slane %v506, 2
        %v508 = vmax.f32 %v506, %v507
        %v509 = vrot.slane %v508, 1
        %v510 = vmax.f32 %v508, %v509
        %v511 = vmax.f32 %v226, %v228
        %v512 = vmax.f32 %v511, %v230
        %v513 = vmax.f32 %v512, %v232
        %v514 = vrot.slane %v513, 4
        %v515 = vmax.f32 %v513, %v514
        %v516 = vrot.slane %v515, 2
        %v517 = vmax.f32 %v515, %v516
        %v518 = vrot.slane %v517, 1
        %v519 = vmax.f32 %v517, %v518
        %v520 = vmax.f32 %v227, %v229
        %v521 = vmax.f32 %v520, %v231
        %v522 = vmax.f32 %v521, %v233
        %v523 = vrot.slane %v522, 4
        %v524 = vmax.f32 %v522, %v523
        %v525 = vrot.slane %v524, 2
        %v526 = vmax.f32 %v524, %v525
        %v527 = vrot.slane %v526, 1
        %v528 = vmax.f32 %v526, %v527
        %v529 = vmax.f32 %v234, %v236
        %v530 = vmax.f32 %v529, %v238
        %v531 = vmax.f32 %v530, %v240
        %v532 = vrot.slane %v531, 4
        %v533 = vmax.f32 %v531, %v532
        %v534 = vrot.slane %v533, 2
        %v535 = vmax.f32 %v533, %v534
        %v536 = vrot.slane %v535, 1
        %v537 = vmax.f32 %v535, %v536
        %v538 = vmax.f32 %v235, %v237
        %v539 = vmax.f32 %v538, %v239
        %v540 = vmax.f32 %v539, %v241
        %v541 = vrot.slane %v540, 4
        %v542 = vmax.f32 %v540, %v541
        %v543 = vrot.slane %v542, 2
        %v544 = vmax.f32 %v542, %v543
        %v545 = vrot.slane %v544, 1
        %v546 = vmax.f32 %v544, %v545
        %v547 = vlaneseq
        %v548 = vand.u32 %v547, 127
        %v549 = vadd.s32 %v548, 128
        %vm566 = vcmask 1041409
        %v567 = vsel %vm566, %v389, %v387
        %vm568 = vcmask 1042434
        %v569 = vsel %vm568, %v391, %v567
        %vm570 = vcmask 1043459
        %v571 = vsel %vm570, %v393, %v569
        %vm572 = vcmask 1044484
        %v573 = vsel %vm572, %v395, %v571
        %vm574 = vcmask 1045509
        %v575 = vsel %vm574, %v397, %v573
        %vm576 = vcmask 1046534
        %v577 = vsel %vm576, %v399, %v575
        %vm578 = vcmask 1047559
        %v579 = vsel %vm578, %v401, %v577
        %v580 = vsel %vm566, %v390, %v388
        %v581 = vsel %vm568, %v392, %v580
        %v582 = vsel %vm570, %v394, %v581
        %v583 = vsel %vm572, %v396, %v582
        %v584 = vsel %vm574, %v398, %v583
        %v585 = vsel %vm576, %v400, %v584
        %v586 = vsel %vm578, %v402, %v585
        %589 = vrot.lane.b32.xlu0 %v579, 1
        %v590 = vpop.permute.xlu0 %589
        %591 = vrot.lane.b32.xlu0 %v586, 1
        %v592 = vpop.permute.xlu0 %591
        %vm593 = vcmp.lt.s32.totalorder %v548, 1
        %v594 = vsel %vm593, %v590, %v592
        %v595 = vsel %vm593, %v592, %v590
        %v612 = vsel %vm566, %v429, %v411
        %v613 = vsel %vm568, %v447, %v612
        %v614 = vsel %vm570, %v465, %v613
        %v615 = vsel %vm572, %v483, %v614
        %v616 = vsel %vm574, %v501, %v615
        %v617 = vsel %vm576, %v519, %v616
        %v618 = vsel %vm578, %v537, %v617
        %v619 = vsel %vm566, %v438, %v420
        %v620 = vsel %vm568, %v456, %v619
        %v621 = vsel %vm570, %v474, %v620
        %v622 = vsel %vm572, %v492, %v621
        %v623 = vsel %vm574, %v510, %v622
        %v624 = vsel %vm576, %v528, %v623
        %v625 = vsel %vm578, %v546, %v624
        %628 = vrot.lane.b32.xlu0 %v618, 1
        %v629 = vpop.permute.xlu0 %628
        %630 = vrot.lane.b32.xlu0 %v625, 1
        %v631 = vpop.permute.xlu0 %630
        %v632 = vsel %vm593, %v629, %v631
        %v633 = vsel %vm593, %v631, %v629
        %s634 = sld [smem:[#allocation6]]
        %v635 = vstv %s634
        %v636 = vmul.f32 %v635, %v595
        %v637 = vmul.f32 %v635, %v594
        %s638 = sld [smem:[#allocation6 + $0x3]]
        %v639 = vstv %s638
        %v640 = vmul.f32 %v639, %v633
        %v641 = vmul.f32 %v639, %v632
        %v642 = vadd.f32 %v636, %v640
        %v643 = vadd.f32 %v637, %v641
        %vm644 = vcmp.ge.s32.totalorder %v548, 1
        %vm645 = vcmp.ge.s32.totalorder %v549, 1
        %v646 = vsel %vm644, %v642, 0.0
        %v647 = vsel %vm645, %v643, 0.0
        %v648 = vadd.f32 %v646, 0.0
        %v649 = vadd.f32 %v647, 0.0
        %s650 = sld [smem:[#allocation6 + $0x1]]
        %v651 = vstv %s650
        %v652 = vmul.f32 %v651, %v387
        %v653 = vmul.f32 %v651, %v388
        %v654 = vmul.f32 %v651, %v389
        %v655 = vmul.f32 %v651, %v390
        %v656 = vmul.f32 %v651, %v391
        %v657 = vmul.f32 %v651, %v392
        %v658 = vmul.f32 %v651, %v393
        %v659 = vmul.f32 %v651, %v394
        %v660 = vmul.f32 %v651, %v395
        %v661 = vmul.f32 %v651, %v396
        %v662 = vmul.f32 %v651, %v397
        %v663 = vmul.f32 %v651, %v398
        %v664 = vmul.f32 %v651, %v399
        %v665 = vmul.f32 %v651, %v400
        %v666 = vmul.f32 %v651, %v401
        %v667 = vmul.f32 %v651, %v402
        %s668 = sld [smem:[#allocation6 + $0x4]]
        %v669 = vstv %s668
        %v670 = vmul.f32 %v669, %v411
        %v671 = vmul.f32 %v669, %v420
        %v672 = vmul.f32 %v669, %v429
        %v673 = vmul.f32 %v669, %v438
        %v674 = vmul.f32 %v669, %v447
        %v675 = vmul.f32 %v669, %v456
        %v676 = vmul.f32 %v669, %v465
        %v677 = vmul.f32 %v669, %v474
        %v678 = vmul.f32 %v669, %v483
        %v679 = vmul.f32 %v669, %v492
        %v680 = vmul.f32 %v669, %v501
        %v681 = vmul.f32 %v669, %v510
        %v682 = vmul.f32 %v669, %v519
        %v683 = vmul.f32 %v669, %v528
        %v684 = vmul.f32 %v669, %v537
        %v685 = vmul.f32 %v669, %v546
        %v686 = vadd.f32 %v652, %v670
        %v687 = vadd.f32 %v653, %v671
        %v688 = vadd.f32 %v654, %v672
        %v689 = vadd.f32 %v655, %v673
        %v690 = vadd.f32 %v656, %v674
        %v691 = vadd.f32 %v657, %v675
        %v692 = vadd.f32 %v658, %v676
        %v693 = vadd.f32 %v659, %v677
        %v694 = vadd.f32 %v660, %v678
        %v695 = vadd.f32 %v661, %v679
        %v696 = vadd.f32 %v662, %v680
        %v697 = vadd.f32 %v663, %v681
        %v698 = vadd.f32 %v664, %v682
        %v699 = vadd.f32 %v665, %v683
        %v700 = vadd.f32 %v666, %v684
        %v701 = vadd.f32 %v667, %v685
        %v718 = vsel %vm566, %v688, %v686
        %v719 = vsel %vm568, %v690, %v718
        %v720 = vsel %vm570, %v692, %v719
        %v721 = vsel %vm572, %v694, %v720
        %v722 = vsel %vm574, %v696, %v721
        %v723 = vsel %vm576, %v698, %v722
        %v724 = vsel %vm578, %v700, %v723
        %v725 = vsel %vm566, %v689, %v687
        %v726 = vsel %vm568, %v691, %v725
        %v727 = vsel %vm570, %v693, %v726
        %v728 = vsel %vm572, %v695, %v727
        %v729 = vsel %vm574, %v697, %v728
        %v730 = vsel %vm576, %v699, %v729
        %v731 = vsel %vm578, %v701, %v730
        %v734 = vadd.f32 %v648, %v724
        %v735 = vadd.f32 %v649, %v731
        %736 = vrot.lane.b32.xlu0 %v579, 127
        %v737 = vpop.permute.xlu0 %736
        %738 = vrot.lane.b32.xlu0 %v586, 127
        %v739 = vpop.permute.xlu0 %738
        %vm740 = vcmp.lt.s32.totalorder %v548, 127
        %v741 = vsel %vm740, %v737, %v739
        %v742 = vsel %vm740, %v739, %v737
        %743 = vrot.lane.b32.xlu0 %v618, 127
        %v744 = vpop.permute.xlu0 %743
        %745 = vrot.lane.b32.xlu0 %v625, 127
        %v746 = vpop.permute.xlu0 %745
        %v747 = vsel %vm740, %v744, %v746
        %v748 = vsel %vm740, %v746, %v744
        %s749 = sld [smem:[#allocation6 + $0x2]]
        %v750 = vstv %s749
        %v751 = vmul.f32 %v750, %v741
        %v752 = vmul.f32 %v750, %v742
        %s753 = sld [smem:[#allocation6 + $0x5]]
        %v754 = vstv %s753
        %v755 = vmul.f32 %v754, %v747
        %v756 = vmul.f32 %v754, %v748
        %v757 = vadd.f32 %v751, %v755
        %v758 = vadd.f32 %v752, %v756
        %vm759 = vcmp.lt.s32.totalorder %v548, 255
        %vm760 = vcmp.lt.s32.totalorder %v549, 255
        %v761 = vsel %vm759, %v757, 0.0
        %v762 = vsel %vm760, %v758, 0.0
        %v763 = vadd.f32 %v734, %v761
        %v764 = vadd.f32 %v735, %v762
        %v765 = vxor.u32 %v763, 2147483648
        %v766 = vxor.u32 %v764, 2147483648
        %v767 = vmul.f32 %v765, 1.442695
        %v768 = vpow.pop %v767
        %v769 = vmul.f32 %v766, 1.442695
        %v770 = vpow.pop %v769
        %v771 = vadd.f32 %v768, 1.0
        %v772 = vadd.f32 %v770, 1.0
        %v773 = vrcp.pop %v771
        %v774 = vmul.f32 1.0, %v773
        %v775 = vrcp.pop %v772
        %v776 = vmul.f32 1.0, %v775
        %777 = vst [vmem:[%s176] sm:$0xff] %v774
        %778 = vst [vmem:[%s176 + $0x8] sm:$0xff] %v776
        %s779 = sand.u32 %s75, 1
        %s780 = scalar_lea.sflag [#allocation4], %s779
        %s781 = sand.u32 %s75, 1
        %s782 = smul.addr %s781, 16
        %s783 = scalar_lea.vmem [#allocation7], %s782
        // Predicated region
        $region37: #{tpu_custom_call.1} parent=27 // pred_check
          %p784 = pneg %p85
        $region38: #{tpu_custom_call.1} parent=27 // pred_check_branch
          %786 = sbr.rel (%p784) target = $region40
        $region39: #{tpu_custom_call.1} parent=27 // pred_region
          %s788 = ssub.s32 256, 256
          %789 = vsyncadd %s780, %s788
          %s790 = smul.addr %s20, 2
          %s791 = smul.addr %s790, 128
          %s792 = scalar_lea.hbm %s2, %s791
          %s794 = sshll.u32 %s783, 4
          %s795 = int_to_ptr.vmem [resolvable:$true] %s794
          %797 = dma.vmem_to_hbm [thread:$0]  %s795, 256, %s792, %s780
        $region40: #{tpu_custom_call.1} parent=27 // pred_fallthru
          _
      $region28: #{tpu_custom_call.1} parent=5 // pred_fallthru
        _
      %p798 = scmp.le.s32.totalorder 2, %s15
      // Predicated region
      $region41: #{tpu_custom_call.1} parent=5 // pred_check
        %p799 = pneg %p798
      $region42: #{tpu_custom_call.1} parent=5 // pred_check_branch
        %801 = sbr.rel (%p799) target = $region44
      $region43: #{tpu_custom_call.1} parent=5 // pred_region
        %s802 = ssub.s32 %s15, 2
        // Predicated region
        $region45: #{tpu_custom_call.1} parent=43 // pred_check
          %p803 = pneg %p91
        $region46: #{tpu_custom_call.1} parent=43 // pred_check_branch
          %805 = sbr.rel (%p803) target = $region48
        $region47: #{tpu_custom_call.1} parent=43 // pred_region
          %s806 = sand.u32 %s76, 1
          %s807 = scalar_lea.sflag [#allocation4], %s806
          %s808 = sand.u32 %s76, 1
          %s809 = smul.addr %s808, 16
          %s810 = scalar_lea.vmem [#allocation7], %s809
          %811 = dma.done %s807, 256
        $region48: #{tpu_custom_call.1} parent=43 // pred_fallthru
          _
      $region44: #{tpu_custom_call.1} parent=5 // pred_fallthru
        _
    $region6: #{tpu_custom_call.1} parent=1 // loop_footer
      %s19 = sadd.s32 1, %s15
    $region7: #{tpu_custom_call.1} parent=1 // loop_footer_branch
      %14 = sbr.rel target = $region3
    $region8: #{tpu_custom_call.1} parent=1 // loop_exit
      _
    %812 = vsyncpa [#allocation3], 1
    %s813 = scalar_lea.sflag [#allocation3], 1
    %814 = vsyncpa %s813, 1
    %815 = vsyncpa [#allocation4], 1
    %s816 = scalar_lea.sflag [#allocation4], 1
    %817 = vsyncpa %s816, 1
    %818 = vsyncpa [#allocation5], 1
    %s819 = scalar_lea.sflag [#allocation5], 1
    %820 = vsyncpa %s819, 1

</llo_original>
